<compile_context>
chip_gen: v5e
topology: v5e:2x2
jax: 0.10.0
libtpu: 0.0.40
codegen_flags: <defaults>
</compile_context>

<pallas_src>
import functools

import jax
import jax.numpy as jnp
from jax import lax
from jax.experimental import pallas as pl
from jax.experimental.pallas import tpu as pltpu


_TAPS = tuple((dh, dw) for dh in (-1, 0, 1) for dw in (-1, 0, 1))


# ---------------------------------------------------------------------------
# Shared per-tap accumulation helper (runs inside the kernels)
# ---------------------------------------------------------------------------
def _accum_taps(acc, x, w_all, cstart, ctot, W, HW, m_left, m_right):
    """Add the 9-tap 3x3-conv contribution of one input channel group.

    x       : (C, HW)        bf16 flattened image group.
    w_all   : (Cout, 9*ctot) bf16 tap-major weights of the whole conv; this
              group's tap-t block is columns [t*ctot+cstart, t*ctot+cstart+C).
    acc     : (Cout, HW)     f32 accumulator.
    m_left / m_right : (1, HW) bf16 multiplicative masks (w>0 / w<W-1).
    """
    C = x.shape[0]
    pad = jnp.zeros((C, W + 1), x.dtype)
    # One ~1.03x zero-padded copy instead of nine shifted concatenate copies.
    xp = jnp.concatenate([pad, x, pad], axis=1)              # (C, HW + 2W + 2)
    for t, (dh, dw) in enumerate(_TAPS):
        off = (W + 1) + dh * W + dw                          # always >= 0
        s = xp[:, off:off + HW]                              # shifted lane view
        # SAME padding: row under/overflow already reads the zero pad; only the
        # 6 dw != 0 taps need a column-boundary mask.
        if dw < 0:
            s = s * m_left
        elif dw > 0:
            s = s * m_right
        wt = w_all[:, t * ctot + cstart: t * ctot + cstart + C]   # (Cout, C)
        acc = acc + jnp.dot(wt, s, preferred_element_type=jnp.float32)
    return acc


# ---------------------------------------------------------------------------
# Kernel 1: plain Conv3x3 + BN(eval) + ReLU   (pyramid level 3)
# ---------------------------------------------------------------------------
def _conv_bn_relu_kernel(x_ref, w_ref, s_ref, b_ref, m_ref, o_ref, *, W):
    # x_ref: (1, Cin, HW) f32 | w_ref: (Cout, 9*Cin) bf16
    # s_ref/b_ref: (Cout, 1) f32 BN scale / folded bias | m_ref: (2, HW) bf16
    # o_ref: (1, Cout, HW) bf16
    HW = x_ref.shape[2]
    x = x_ref[0].astype(jnp.bfloat16)            # in-kernel cast, no HBM pass
    cin = x.shape[0]
    cout = o_ref.shape[1]
    masks = m_ref[...]
    m_left, m_right = masks[0:1, :], masks[1:2, :]
    acc = jnp.zeros((cout, HW), jnp.float32)
    acc = _accum_taps(acc, x, w_ref[...], 0, cin, W, HW, m_left, m_right)
    # f32 epilogue: BN scale, folded bias, ReLU, bf16 lane-dense store.
    o_ref[0] = jnp.maximum(acc * s_ref[...] + b_ref[...], 0.0).astype(o_ref.dtype)


# ---------------------------------------------------------------------------
# Kernel 2: fused [nearest-2x upsample(prev) ++ skip] -> Conv3x3 + BN + ReLU
# ---------------------------------------------------------------------------
def _up_cat_conv_bn_relu_kernel(prev_ref, skip_ref, up_ref, w_ref, s_ref,
                                b_ref, m_ref, o_ref, *, W):
    # prev_ref: (1, Cup, Hs*Ws) bf16  coarser-level Pallas output
    # skip_ref: (1, Csk, HW)    f32   lateral feature at this level
    # up_ref  : (Hs*Ws, HW)     bf16  one-hot nearest-2x upsample matrix
    # w_ref   : (Cout, 9*(Cup+Csk)) bf16, channel order [upsampled | skip]
    HW = skip_ref.shape[2]
    cup = prev_ref.shape[1]
    csk = skip_ref.shape[1]
    ctot = cup + csk
    cout = o_ref.shape[1]

    # In-kernel nearest-2x upsample as a one-hot gather matmul: exact (each
    # output picks one bf16 value) and rides the otherwise-idle MXU, so the
    # upsampled tensor never exists in HBM.
    x_up = jnp.dot(prev_ref[0], up_ref[...],
                   preferred_element_type=jnp.float32).astype(jnp.bfloat16)
    x_sk = skip_ref[0].astype(jnp.bfloat16)

    masks = m_ref[...]
    m_left, m_right = masks[0:1, :], masks[1:2, :]
    w = w_ref[...]
    acc = jnp.zeros((cout, HW), jnp.float32)
    acc = _accum_taps(acc, x_up, w, 0, ctot, W, HW, m_left, m_right)    # K-group 1
    acc = _accum_taps(acc, x_sk, w, cup, ctot, W, HW, m_left, m_right)  # K-group 2
    o_ref[0] = jnp.maximum(acc * s_ref[...] + b_ref[...], 0.0).astype(o_ref.dtype)


# ---------------------------------------------------------------------------
# Wrapper-side small constants / parameter folding
# ---------------------------------------------------------------------------
def _col_masks(H, W):
    col = jnp.arange(H * W, dtype=jnp.int32) % W
    return jnp.stack([(col > 0), (col < W - 1)], axis=0).astype(jnp.bfloat16)


def _nearest_up_matrix(Hs, Ws):
    H, W = 2 * Hs, 2 * Ws
    p = jnp.arange(H * W, dtype=jnp.int32)
    src = (p // W // 2) * Ws + (p % W) // 2
    return (jnp.arange(Hs * Ws, dtype=jnp.int32)[:, None] == src[None, :]
            ).astype(jnp.bfloat16)                                # (Hs*Ws, H*W)


def _fold_conv_bn(w_hwio, conv_b, gamma, beta, mean, var, eps=1e-5):
    cout = w_hwio.shape[-1]
    cin = w_hwio.shape[2]
    scale = (gamma / jnp.sqrt(var + eps)).astype(jnp.float32)
    bias = ((conv_b - mean) * scale + beta).astype(jnp.float32)
    # (kh, kw, ci, co) -> (co, kh, kw, ci) -> (Cout, 9*Cin); col = (kh*3+kw)*Cin+ci.
    # BN scale stays f32 and is applied in the kernel epilogue (precision).
    wmat = jnp.transpose(w_hwio, (3, 0, 1, 2)).reshape(cout, 9 * cin)
    return wmat.astype(jnp.bfloat16), scale.reshape(cout, 1), bias.reshape(cout, 1)


# ---------------------------------------------------------------------------
# Per-level pallas_call wrappers (operate on flattened (N, C, H*W) arrays)
# ---------------------------------------------------------------------------
def conv_level(x_flat, wmat, scale, bias, H, W):
    N, cin, HW = x_flat.shape
    cout = wmat.shape[0]
    masks = _col_masks(H, W)
    kernel = functools.partial(_conv_bn_relu_kernel, W=W)
    return pl.pallas_call(
        kernel,
        out_shape=jax.ShapeDtypeStruct((N, cout, HW), jnp.bfloat16),
        grid=(N,),
        in_specs=[
            pl.BlockSpec((1, cin, HW), lambda n: (n, 0, 0)),
            pl.BlockSpec((cout, 9 * cin), lambda n: (0, 0)),
            pl.BlockSpec((cout, 1), lambda n: (0, 0)),
            pl.BlockSpec((cout, 1), lambda n: (0, 0)),
            pl.BlockSpec((2, HW), lambda n: (0, 0)),
        ],
        out_specs=pl.BlockSpec((1, cout, HW), lambda n: (n, 0, 0)),
        compiler_params=pltpu.CompilerParams(dimension_semantics=("parallel",)),
        cost_estimate=pl.CostEstimate(
            flops=2 * N * HW * 9 * cin * cout,
            transcendentals=0,
            bytes_accessed=int(N * cin * HW * 4 + wmat.size * 2
                               + N * cout * HW * 2)),
    )(x_flat, wmat, scale, bias, masks)


def fused_level(prev_flat, skip_flat, wmat, scale, bias, Hs, Ws, H, W):
    assert (2 * Hs, 2 * Ws) == (H, W)
    N, cup, hws = prev_flat.shape
    _, csk, HW = skip_flat.shape
    cout = wmat.shape[0]
    up = _nearest_up_matrix(Hs, Ws)
    masks = _col_masks(H, W)
    kernel = functools.partial(_up_cat_conv_bn_relu_kernel, W=W)
    return pl.pallas_call(
        kernel,
        out_shape=jax.ShapeDtypeStruct((N, cout, HW), jnp.bfloat16),
        grid=(N,),
        in_specs=[
            pl.BlockSpec((1, cup, hws), lambda n: (n, 0, 0)),
            pl.BlockSpec((1, csk, HW), lambda n: (n, 0, 0)),
            pl.BlockSpec((hws, HW), lambda n: (0, 0)),
            pl.BlockSpec((cout, 9 * (cup + csk)), lambda n: (0, 0)),
            pl.BlockSpec((cout, 1), lambda n: (0, 0)),
            pl.BlockSpec((cout, 1), lambda n: (0, 0)),
            pl.BlockSpec((2, HW), lambda n: (0, 0)),
        ],
        out_specs=pl.BlockSpec((1, cout, HW), lambda n: (n, 0, 0)),
        compiler_params=pltpu.CompilerParams(dimension_semantics=("parallel",)),
        cost_estimate=pl.CostEstimate(
            flops=2 * N * HW * (9 * (cup + csk) * cout + cup * hws),
            transcendentals=0,
            bytes_accessed=int(N * cup * hws * 2 + N * csk * HW * 4
                               + up.size * 2 + wmat.size * 2
                               + N * cout * HW * 2)),
    )(prev_flat, skip_flat, up, wmat, scale, bias, masks)


# ---------------------------------------------------------------------------
# NeckModule forward (Pallas) — 3 pallas_calls, no inter-level HBM glue
# ---------------------------------------------------------------------------
def neck_forward(f1, f2, f3, p_conv3, p_conv2, p_conv1):
    N, c1, H1, W1 = f1.shape
    _, c2, H2, W2 = f2.shape
    _, c3, H3, W3 = f3.shape

    w3, s3, b3 = _fold_conv_bn(*p_conv3)
    w2, s2, b2 = _fold_conv_bn(*p_conv2)
    w1, s1, b1 = _fold_conv_bn(*p_conv1)

    f3o = conv_level(f3.reshape(N, c3, H3 * W3), w3, s3, b3, H3, W3)
    f2o = fused_level(f3o, f2.reshape(N, c2, H2 * W2), w2, s2, b2,
                      H3, W3, H2, W2)
    f1o = fused_level(f2o, f1.reshape(N, c1, H1 * W1), w1, s1, b1,
                      H2, W2, H1, W1)

    cc = f3o.shape[1]
    return (f1o.reshape(N, cc, H1, W1),
            f2o.reshape(N, cc, H2, W2),
            f3o.reshape(N, cc, H3, W3))


# ---------------------------------------------------------------------------
# Parameter construction (deterministic, synthetic) and pure-JAX f32 reference
# ---------------------------------------------------------------------------
def make_conv_bn_params(key, c_in, c_out):
    k_w, k_b, k_g, k_be, k_m, k_v = jax.random.split(key, 6)
    w = jax.random.normal(k_w, (3, 3, c_in, c_out), jnp.float32) * 0.1   # HWIO
    b = jax.random.normal(k_b, (c_out,), jnp.float32) * 0.1
    gamma = 1.0 + 0.1 * jax.random.normal(k_g, (c_out,), jnp.float32)
    beta = 0.1 * jax.random.normal(k_be, (c_out,), jnp.float32)
    mean = 0.1 * jax.random.normal(k_m, (c_out,), jnp.float32)
    var = 1.0 + 0.1 * jnp.abs(jax.random.normal(k_v, (c_out,), jnp.float32))
    return (w, b, gamma, beta, mean, var)


def upsample2x_nearest(x_nchw):
    return jnp.repeat(jnp.repeat(x_nchw, 2, axis=2), 2, axis=3)


def _ref_conv_bn_relu(x, w, b, gamma, beta, mean, var, eps=1e-5):
    def _bc(v):
        return v.reshape(1, -1, 1, 1)
    y = lax.conv_general_dilated(
        x, w, window_strides=(1, 1), padding="SAME",
        dimension_numbers=("NCHW", "HWIO", "NCHW")) + _bc(b)
    y = (y - _bc(mean)) / jnp.sqrt(_bc(var) + eps) * _bc(gamma) + _bc(beta)
    return jnp.maximum(y, 0.0)


def neck_forward_ref(f1, f2, f3, p_conv3, p_conv2, p_conv1):
    f3o = _ref_conv_bn_relu(f3, *p_conv3)
    x = jnp.concatenate([upsample2x_nearest(f3o), f2], axis=1)
    f2o = _ref_conv_bn_relu(x, *p_conv2)
    x = jnp.concatenate([upsample2x_nearest(f2o), f1], axis=1)
    f1o = _ref_conv_bn_relu(x, *p_conv1)
    return f1o, f2o, f3o


# ---------------------------------------------------------------------------
if __name__ == "__main__":
    # Small shapes: c1=4, c2=8, c3=16 -> cc = min = 4; cls_num unused in fwd.
    N = 2
    c1, c2, c3 = 4, 8, 16
    cc = min(c1, c2, c3)
    H1 = W1 = 32
    H2 = W2 = 16
    H3 = W3 = 8

    key = jax.random.PRNGKey(0)
    k_f1, k_f2, k_f3, k_p3, k_p2, k_p1 = jax.random.split(key, 6)

    f1 = jax.random.normal(k_f1, (N, c1, H1, W1), jnp.float32)
    f2 = jax.random.normal(k_f2, (N, c2, H2, W2), jnp.float32)
    f3 = jax.random.normal(k_f3, (N, c3, H3, W3), jnp.float32)

    p_conv3 = make_conv_bn_params(k_p3, c3, cc)          # conv3: c3 -> cc
    p_conv2 = make_conv_bn_params(k_p2, cc + c2, cc)     # conv2: cc+c2 -> cc
    p_conv1 = make_conv_bn_params(k_p1, cc + c1, cc)     # conv1: cc+c1 -> cc

    out = neck_forward(f1, f2, f3, p_conv3, p_conv2, p_conv1)
    out = jax.block_until_ready(out)

    ref = neck_forward_ref(f1, f2, f3, p_conv3, p_conv2, p_conv1)
    for o, r in zip(out, ref):
        assert o.shape == r.shape, (o.shape, r.shape)
        # bf16 activations/weights/outputs with f32 accumulation & epilogue.
        o32 = o.astype(jnp.float32)
        assert jnp.allclose(o32, r, atol=5e-2, rtol=5e-2), \
            f"max err {jnp.max(jnp.abs(o32 - r))}"

    print("KERNEL_OK")
</pallas_src>

<mosaic_0001>
module attributes {stable_mosaic.version = 11 : i64} {
  func.func @_conv_bn_relu_kernel(%arg0: i32, %arg1: memref<1x16x64xf32, #tpu.memory_space<vmem>>, %arg2: memref<4x144xbf16, #tpu.memory_space<vmem>>, %arg3: memref<4x1xf32, #tpu.memory_space<vmem>>, %arg4: memref<4x1xf32, #tpu.memory_space<vmem>>, %arg5: memref<2x64xbf16, #tpu.memory_space<vmem>>, %arg6: memref<1x4x64xbf16, #tpu.memory_space<vmem>>) attributes {dimension_semantics = [#tpu.dimension_semantics<parallel>], iteration_bounds = array<i64: 2>, scalar_prefetch = 0 : i64, scratch_operands = 0 : i64, tpu.core_type = #tpu.core_type<tc>, window_params = [{transform_indices = @transform_0, window_bounds = array<i64: 1, 16, 64>}, {pipeline_mode = #tpu.pipeline_mode<synchronous>, transform_indices = @transform_1, window_bounds = array<i64: 4, 144>}, {pipeline_mode = #tpu.pipeline_mode<synchronous>, transform_indices = @transform_2, window_bounds = array<i64: 4, 1>}, {pipeline_mode = #tpu.pipeline_mode<synchronous>, transform_indices = @transform_3, window_bounds = array<i64: 4, 1>}, {pipeline_mode = #tpu.pipeline_mode<synchronous>, transform_indices = @transform_4, window_bounds = array<i64: 2, 64>}, {transform_indices = @transform_5, window_bounds = array<i64: 1, 4, 64>}]} {
    %c0 = arith.constant 0 : index
    %c0_0 = arith.constant 0 : index
    %c0_1 = arith.constant 0 : index
    %0 = vector.load %arg1[%c0, %c0_0, %c0_1] : memref<1x16x64xf32, #tpu.memory_space<vmem>>, vector<1x16x64xf32>
    %1 = vector.shape_cast %0 : vector<1x16x64xf32> to vector<16x64xf32>
    %2 = arith.truncf %1 : vector<16x64xf32> to vector<16x64xbf16>
    %c0_2 = arith.constant 0 : index
    %c0_3 = arith.constant 0 : index
    %3 = vector.load %arg5[%c0_2, %c0_3] : memref<2x64xbf16, #tpu.memory_space<vmem>>, vector<2x64xbf16>
    %4 = vector.extract_strided_slice %3 {offsets = [0, 0], sizes = [1, 64], strides = [1, 1]} : vector<2x64xbf16> to vector<1x64xbf16>
    %5 = vector.extract_strided_slice %3 {offsets = [1, 0], sizes = [1, 64], strides = [1, 1]} : vector<2x64xbf16> to vector<1x64xbf16>
    %cst = arith.constant 0.000000e+00 : f32
    %6 = vector.broadcast %cst : f32 to vector<4x64xf32>
    %c0_4 = arith.constant 0 : index
    %c0_5 = arith.constant 0 : index
    %7 = vector.load %arg2[%c0_4, %c0_5] : memref<4x144xbf16, #tpu.memory_space<vmem>>, vector<4x144xbf16>
    %cst_6 = arith.constant 0.000000e+00 : bf16
    %8 = vector.broadcast %cst_6 : bf16 to vector<16x9xbf16>
    %9 = tpu.concatenate %8, %2, %8 in 1 : vector<16x9xbf16>, vector<16x64xbf16>, vector<16x9xbf16> -> vector<16x82xbf16>
    %10 = vector.extract_strided_slice %9 {offsets = [0, 0], sizes = [16, 64], strides = [1, 1]} : vector<16x82xbf16> to vector<16x64xbf16>
    %11 = vector.broadcast %4 : vector<1x64xbf16> to vector<16x64xbf16>
    %12 = arith.mulf %10, %11 : vector<16x64xbf16>
    %13 = vector.extract_strided_slice %7 {offsets = [0, 0], sizes = [4, 16], strides = [1, 1]} : vector<4x144xbf16> to vector<4x16xbf16>
    %cst_7 = arith.constant dense<0.000000e+00> : vector<4x64xf32>
    %14 = tpu.matmul %13, %12, %cst_7 {dimension_numbers = #tpu.dot_dimension_numbers<[1], [0], [0], [1], [0, 0, 1, 1], [], []>} : vector<4x16xbf16>, vector<16x64xbf16>, vector<4x64xf32> -> vector<4x64xf32>
    %15 = arith.addf %6, %14 : vector<4x64xf32>
    %16 = vector.extract_strided_slice %9 {offsets = [0, 1], sizes = [16, 64], strides = [1, 1]} : vector<16x82xbf16> to vector<16x64xbf16>
    %17 = vector.extract_strided_slice %7 {offsets = [0, 16], sizes = [4, 16], strides = [1, 1]} : vector<4x144xbf16> to vector<4x16xbf16>
    %cst_8 = arith.constant dense<0.000000e+00> : vector<4x64xf32>
    %18 = tpu.matmul %17, %16, %cst_8 {dimension_numbers = #tpu.dot_dimension_numbers<[1], [0], [0], [1], [0, 0, 1, 1], [], []>} : vector<4x16xbf16>, vector<16x64xbf16>, vector<4x64xf32> -> vector<4x64xf32>
    %19 = arith.addf %15, %18 : vector<4x64xf32>
    %20 = vector.extract_strided_slice %9 {offsets = [0, 2], sizes = [16, 64], strides = [1, 1]} : vector<16x82xbf16> to vector<16x64xbf16>
    %21 = vector.broadcast %5 : vector<1x64xbf16> to vector<16x64xbf16>
    %22 = arith.mulf %20, %21 : vector<16x64xbf16>
    %23 = vector.extract_strided_slice %7 {offsets = [0, 32], sizes = [4, 16], strides = [1, 1]} : vector<4x144xbf16> to vector<4x16xbf16>
    %cst_9 = arith.constant dense<0.000000e+00> : vector<4x64xf32>
    %24 = tpu.matmul %23, %22, %cst_9 {dimension_numbers = #tpu.dot_dimension_numbers<[1], [0], [0], [1], [0, 0, 1, 1], [], []>} : vector<4x16xbf16>, vector<16x64xbf16>, vector<4x64xf32> -> vector<4x64xf32>
    %25 = arith.addf %19, %24 : vector<4x64xf32>
    %26 = vector.extract_strided_slice %9 {offsets = [0, 8], sizes = [16, 64], strides = [1, 1]} : vector<16x82xbf16> to vector<16x64xbf16>
    %27 = vector.broadcast %4 : vector<1x64xbf16> to vector<16x64xbf16>
    %28 = arith.mulf %26, %27 : vector<16x64xbf16>
    %29 = vector.extract_strided_slice %7 {offsets = [0, 48], sizes = [4, 16], strides = [1, 1]} : vector<4x144xbf16> to vector<4x16xbf16>
    %cst_10 = arith.constant dense<0.000000e+00> : vector<4x64xf32>
    %30 = tpu.matmul %29, %28, %cst_10 {dimension_numbers = #tpu.dot_dimension_numbers<[1], [0], [0], [1], [0, 0, 1, 1], [], []>} : vector<4x16xbf16>, vector<16x64xbf16>, vector<4x64xf32> -> vector<4x64xf32>
    %31 = arith.addf %25, %30 : vector<4x64xf32>
    %32 = vector.extract_strided_slice %9 {offsets = [0, 9], sizes = [16, 64], strides = [1, 1]} : vector<16x82xbf16> to vector<16x64xbf16>
    %33 = vector.extract_strided_slice %7 {offsets = [0, 64], sizes = [4, 16], strides = [1, 1]} : vector<4x144xbf16> to vector<4x16xbf16>
    %cst_11 = arith.constant dense<0.000000e+00> : vector<4x64xf32>
    %34 = tpu.matmul %33, %32, %cst_11 {dimension_numbers = #tpu.dot_dimension_numbers<[1], [0], [0], [1], [0, 0, 1, 1], [], []>} : vector<4x16xbf16>, vector<16x64xbf16>, vector<4x64xf32> -> vector<4x64xf32>
    %35 = arith.addf %31, %34 : vector<4x64xf32>
    %36 = vector.extract_strided_slice %9 {offsets = [0, 10], sizes = [16, 64], strides = [1, 1]} : vector<16x82xbf16> to vector<16x64xbf16>
    %37 = vector.broadcast %5 : vector<1x64xbf16> to vector<16x64xbf16>
    %38 = arith.mulf %36, %37 : vector<16x64xbf16>
    %39 = vector.extract_strided_slice %7 {offsets = [0, 80], sizes = [4, 16], strides = [1, 1]} : vector<4x144xbf16> to vector<4x16xbf16>
    %cst_12 = arith.constant dense<0.000000e+00> : vector<4x64xf32>
    %40 = tpu.matmul %39, %38, %cst_12 {dimension_numbers = #tpu.dot_dimension_numbers<[1], [0], [0], [1], [0, 0, 1, 1], [], []>} : vector<4x16xbf16>, vector<16x64xbf16>, vector<4x64xf32> -> vector<4x64xf32>
    %41 = arith.addf %35, %40 : vector<4x64xf32>
    %42 = vector.extract_strided_slice %9 {offsets = [0, 16], sizes = [16, 64], strides = [1, 1]} : vector<16x82xbf16> to vector<16x64xbf16>
    %43 = vector.broadcast %4 : vector<1x64xbf16> to vector<16x64xbf16>
    %44 = arith.mulf %42, %43 : vector<16x64xbf16>
    %45 = vector.extract_strided_slice %7 {offsets = [0, 96], sizes = [4, 16], strides = [1, 1]} : vector<4x144xbf16> to vector<4x16xbf16>
    %cst_13 = arith.constant dense<0.000000e+00> : vector<4x64xf32>
    %46 = tpu.matmul %45, %44, %cst_13 {dimension_numbers = #tpu.dot_dimension_numbers<[1], [0], [0], [1], [0, 0, 1, 1], [], []>} : vector<4x16xbf16>, vector<16x64xbf16>, vector<4x64xf32> -> vector<4x64xf32>
    %47 = arith.addf %41, %46 : vector<4x64xf32>
    %48 = vector.extract_strided_slice %9 {offsets = [0, 17], sizes = [16, 64], strides = [1, 1]} : vector<16x82xbf16> to vector<16x64xbf16>
    %49 = vector.extract_strided_slice %7 {offsets = [0, 112], sizes = [4, 16], strides = [1, 1]} : vector<4x144xbf16> to vector<4x16xbf16>
    %cst_14 = arith.constant dense<0.000000e+00> : vector<4x64xf32>
    %50 = tpu.matmul %49, %48, %cst_14 {dimension_numbers = #tpu.dot_dimension_numbers<[1], [0], [0], [1], [0, 0, 1, 1], [], []>} : vector<4x16xbf16>, vector<16x64xbf16>, vector<4x64xf32> -> vector<4x64xf32>
    %51 = arith.addf %47, %50 : vector<4x64xf32>
    %52 = vector.extract_strided_slice %9 {offsets = [0, 18], sizes = [16, 64], strides = [1, 1]} : vector<16x82xbf16> to vector<16x64xbf16>
    %53 = vector.broadcast %5 : vector<1x64xbf16> to vector<16x64xbf16>
    %54 = arith.mulf %52, %53 : vector<16x64xbf16>
    %55 = vector.extract_strided_slice %7 {offsets = [0, 128], sizes = [4, 16], strides = [1, 1]} : vector<4x144xbf16> to vector<4x16xbf16>
    %cst_15 = arith.constant dense<0.000000e+00> : vector<4x64xf32>
    %56 = tpu.matmul %55, %54, %cst_15 {dimension_numbers = #tpu.dot_dimension_numbers<[1], [0], [0], [1], [0, 0, 1, 1], [], []>} : vector<4x16xbf16>, vector<16x64xbf16>, vector<4x64xf32> -> vector<4x64xf32>
    %57 = arith.addf %51, %56 : vector<4x64xf32>
    %c0_16 = arith.constant 0 : index
    %c0_17 = arith.constant 0 : index
    %58 = vector.load %arg3[%c0_16, %c0_17] : memref<4x1xf32, #tpu.memory_space<vmem>>, vector<4x1xf32>
    %59 = vector.broadcast %58 : vector<4x1xf32> to vector<4x64xf32>
    %60 = arith.mulf %57, %59 : vector<4x64xf32>
    %c0_18 = arith.constant 0 : index
    %c0_19 = arith.constant 0 : index
    %61 = vector.load %arg4[%c0_18, %c0_19] : memref<4x1xf32, #tpu.memory_space<vmem>>, vector<4x1xf32>
    %62 = vector.broadcast %61 : vector<4x1xf32> to vector<4x64xf32>
    %63 = arith.addf %60, %62 : vector<4x64xf32>
    %cst_20 = arith.constant 0.000000e+00 : f32
    %64 = vector.broadcast %cst_20 : f32 to vector<4x64xf32>
    %65 = arith.maximumf %63, %64 : vector<4x64xf32>
    %66 = arith.truncf %65 : vector<4x64xf32> to vector<4x64xbf16>
    %c0_21 = arith.constant 0 : index
    %c0_22 = arith.constant 0 : index
    %c0_23 = arith.constant 0 : index
    %67 = vector.load %arg6[%c0_21, %c0_22, %c0_23] : memref<1x4x64xbf16, #tpu.memory_space<vmem>>, vector<1x4x64xbf16>
    %68 = vector.shape_cast %67 : vector<1x4x64xbf16> to vector<4x64xbf16>
    %69 = vector.shape_cast %66 : vector<4x64xbf16> to vector<1x4x64xbf16>
    tpu.vector_store %arg6[%c0_21, %c0_22, %c0_23], %69 {strides = array<i32>} : memref<1x4x64xbf16, #tpu.memory_space<vmem>>, vector<1x4x64xbf16>,
    return
  }
  func.func @transform_0(%arg0: i32) -> (i32, i32, i32) {
    %c0_i32 = arith.constant 0 : i32
    %c0_i32_0 = arith.constant 0 : i32
    %c0_i32_1 = arith.constant 0 : i32
    return %arg0, %c0_i32, %c0_i32_0 : i32, i32, i32
  }
  func.func @transform_1(%arg0: i32) -> (i32, i32) {
    %c0_i32 = arith.constant 0 : i32
    %c0_i32_0 = arith.constant 0 : i32
    %c0_i32_1 = arith.constant 0 : i32
    return %c0_i32, %c0_i32_0 : i32, i32
  }
  func.func @transform_2(%arg0: i32) -> (i32, i32) {
    %c0_i32 = arith.constant 0 : i32
    %c0_i32_0 = arith.constant 0 : i32
    %c0_i32_1 = arith.constant 0 : i32
    return %c0_i32, %c0_i32_0 : i32, i32
  }
  func.func @transform_3(%arg0: i32) -> (i32, i32) {
    %c0_i32 = arith.constant 0 : i32
    %c0_i32_0 = arith.constant 0 : i32
    %c0_i32_1 = arith.constant 0 : i32
    return %c0_i32, %c0_i32_0 : i32, i32
  }
  func.func @transform_4(%arg0: i32) -> (i32, i32) {
    %c0_i32 = arith.constant 0 : i32
    %c0_i32_0 = arith.constant 0 : i32
    %c0_i32_1 = arith.constant 0 : i32
    return %c0_i32, %c0_i32_0 : i32, i32
  }
  func.func @transform_5(%arg0: i32) -> (i32, i32, i32) {
    %c0_i32 = arith.constant 0 : i32
    %c0_i32_0 = arith.constant 0 : i32
    %c0_i32_1 = arith.constant 0 : i32
    return %arg0, %c0_i32, %c0_i32_0 : i32, i32, i32
  }
}

</mosaic_0001>

<llo_original>
// kernel: tpu_custom_call.1
$region0: #{tpu_custom_call.1}
  #allocation0 [shape = 'u32[]', space=smem, size = 0x4, offset = 0x4, fixed_abs, tag = 'smem constant byte address 0x4 - core index']
  #allocation1 [shape = 'u32[72,128]{1,0:T(1,128)}', space=vmem, size = 0x9000, scoped, tag = 'internal scratch']
  %s0 = inlined_call_operand.hbm [shape: f32[2,16,64], index: 0, kind: input, shape index: {}]
  %s1 = inlined_call_operand.vmem [shape: bf16[4,144], index: 1, kind: input, shape index: {}]
  %s2 = inlined_call_operand.vmem [shape: f32[4,1], index: 2, kind: input, shape index: {}]
  %s3 = inlined_call_operand.vmem [shape: f32[4,1], index: 3, kind: input, shape index: {}]
  %s4 = inlined_call_operand.vmem [shape: bf16[2,64], index: 4, kind: input, shape index: {}]
  %s5 = inlined_call_operand.hbm [shape: bf16[2,4,64], index: 5, kind: output, shape index: {}]
  %s6 = sld [smem:[#allocation0]]
  $region57: #{tpu_custom_call.1} parent=0
    _
  %s8 = ssub.s32 1, %s6
  %s9 = scalar_select 0, %s8, %s6
  $region1: #{tpu_custom_call.1} parent=0
    #allocation2 [shape = 'u8[16384]{0}', space=vmem, size = 0x4000, scoped, tag = 'input window, operand 0']
    #allocation3 [shape = 's32[2]{0}', space=sflag, size = 0x8, scoped, tag = 'scoped memory for tpu_custom_call.1']
    #allocation4 [shape = 's32[2]{0}', space=sflag, size = 0x8, scoped, tag = 'scoped memory for tpu_custom_call.1']
    #allocation5 [shape = 'u8[2048]{0}', space=vmem, size = 0x800, scoped, tag = 'output window, operand 0']
    %10 = vsyncpa [#allocation3], 0
    %s11 = scalar_lea.sflag [#allocation3], 1
    %12 = vsyncpa %s11, 0
    %13 = vsyncpa [#allocation4], 0
    %s14 = scalar_lea.sflag [#allocation4], 1
    %15 = vsyncpa %s14, 0
    loop: start=0, step=1, limit=4
    $region2: #{tpu_custom_call.1} parent=1 // loop_pre_header
      _
    $region3: #{tpu_custom_call.1} parent=1 // loop_header
      %s17 = sphi 0, %s21
      %p18 = scmp.ge.s32.totalorder %s17, 4
      %s27 = sphi 0, %s29
      %s30 = sphi 0, %s27
      %s31 = sphi 0, %s30
      %s47 = sphi 0, %s31
      %s51 = sphi 0, %s51
      %s53 = sphi 0, %s51
      %s54 = sphi 0, %s53
      %s68 = sphi 0, %s54
      %s72 = sphi 0, %s72
      %s74 = sphi 0, %s72
      %s75 = sphi 0, %s74
      %s89 = sphi 0, %s75
      %s93 = sphi 0, %s93
      %s95 = sphi 0, %s93
      %s96 = sphi 0, %s95
      %s110 = sphi 0, %s96
      %s114 = sphi 0, %s114
      %s116 = sphi 0, %s114
      %s117 = sphi 0, %s116
      %s131 = sphi 0, %s117
      %s137 = sphi 0, %s139
      %s140 = sphi 0, %s137
      %s141 = sphi 0, %s140
      %s157 = sphi 0, %s141
    $region4: #{tpu_custom_call.1} parent=1 // loop_header_branch
      %20 = sbr.rel (%p18) target = $region8
    $region5: #{tpu_custom_call.1} parent=1 // loop_body
      %s22 = ssub.s32 %s17, 1
      %s23 = ssub.s32 %s17, 2
      %s24 = sadd.s32 %s17, 1
      %s25 = ssub.s32 %s17, %s24
      %p26 = scmp.eq.s32.totalorder %s25, 0
      %s28 = sadd.s32 %s27, 1
      %s29 = scalar_select %p26, %s27, %s28
      %p32 = pneg %p26
      %p33 = scmp.eq.s32.totalorder %s17, 1
      %p34 = por %p32, %p33
      %p35 = scmp.ne.s32.totalorder %s27, %s30
      %p36 = scmp.eq.s32.totalorder %s17, 0
      %p37 = por %p35, %p36
      %p38 = scmp.ne.s32.totalorder %s27, %s30
      %p39 = scmp.eq.s32.totalorder %s22, 1
      %p40 = por %p38, %p39
      %p41 = scmp.ne.s32.totalorder %s30, %s31
      %p42 = scmp.eq.s32.totalorder %s22, 0
      %p43 = por %p41, %p42
      %p44 = scmp.ne.s32.totalorder %s30, %s31
      %p45 = scmp.eq.s32.totalorder %s23, 1
      %p46 = por %p44, %p45
      %p48 = scmp.ne.s32.totalorder %s31, %s47
      %p49 = scmp.eq.s32.totalorder %s23, 0
      %p50 = por %p48, %p49
      %s52 = sadd.s32 %s51, 1
      %p55 = scmp.eq.s32.totalorder %s17, 1
      %p56 = scmp.ne.s32.totalorder %s51, %s53
      %p57 = scmp.eq.s32.totalorder %s17, 0
      %p58 = por %p56, %p57
      %p59 = scmp.ne.s32.totalorder %s51, %s53
      %p60 = scmp.eq.s32.totalorder %s22, 1
      %p61 = por %p59, %p60
      %p62 = scmp.ne.s32.totalorder %s53, %s54
      %p63 = scmp.eq.s32.totalorder %s22, 0
      %p64 = por %p62, %p63
      %p65 = scmp.ne.s32.totalorder %s53, %s54
      %p66 = scmp.eq.s32.totalorder %s23, 1
      %p67 = por %p65, %p66
      %p69 = scmp.ne.s32.totalorder %s54, %s68
      %p70 = scmp.eq.s32.totalorder %s23, 0
      %p71 = por %p69, %p70
      %s73 = sadd.s32 %s72, 1
      %p76 = scmp.eq.s32.totalorder %s17, 1
      %p77 = scmp.ne.s32.totalorder %s72, %s74
      %p78 = scmp.eq.s32.totalorder %s17, 0
      %p79 = por %p77, %p78
      %p80 = scmp.ne.s32.totalorder %s72, %s74
      %p81 = scmp.eq.s32.totalorder %s22, 1
      %p82 = por %p80, %p81
      %p83 = scmp.ne.s32.totalorder %s74, %s75
      %p84 = scmp.eq.s32.totalorder %s22, 0
      %p85 = por %p83, %p84
      %p86 = scmp.ne.s32.totalorder %s74, %s75
      %p87 = scmp.eq.s32.totalorder %s23, 1
      %p88 = por %p86, %p87
      %p90 = scmp.ne.s32.totalorder %s75, %s89
      %p91 = scmp.eq.s32.totalorder %s23, 0
      %p92 = por %p90, %p91
      %s94 = sadd.s32 %s93, 1
      %p97 = scmp.eq.s32.totalorder %s17, 1
      %p98 = scmp.ne.s32.totalorder %s93, %s95
      %p99 = scmp.eq.s32.totalorder %s17, 0
      %p100 = por %p98, %p99
      %p101 = scmp.ne.s32.totalorder %s93, %s95
      %p102 = scmp.eq.s32.totalorder %s22, 1
      %p103 = por %p101, %p102
      %p104 = scmp.ne.s32.totalorder %s95, %s96
      %p105 = scmp.eq.s32.totalorder %s22, 0
      %p106 = por %p104, %p105
      %p107 = scmp.ne.s32.totalorder %s95, %s96
      %p108 = scmp.eq.s32.totalorder %s23, 1
      %p109 = por %p107, %p108
      %p111 = scmp.ne.s32.totalorder %s96, %s110
      %p112 = scmp.eq.s32.totalorder %s23, 0
      %p113 = por %p111, %p112
      %s115 = sadd.s32 %s114, 1
      %p118 = scmp.eq.s32.totalorder %s17, 1
      %p119 = scmp.ne.s32.totalorder %s114, %s116
      %p120 = scmp.eq.s32.totalorder %s17, 0
      %p121 = por %p119, %p120
      %p122 = scmp.ne.s32.totalorder %s114, %s116
      %p123 = scmp.eq.s32.totalorder %s22, 1
      %p124 = por %p122, %p123
      %p125 = scmp.ne.s32.totalorder %s116, %s117
      %p126 = scmp.eq.s32.totalorder %s22, 0
      %p127 = por %p125, %p126
      %p128 = scmp.ne.s32.totalorder %s116, %s117
      %p129 = scmp.eq.s32.totalorder %s23, 1
      %p130 = por %p128, %p129
      %p132 = scmp.ne.s32.totalorder %s117, %s131
      %p133 = scmp.eq.s32.totalorder %s23, 0
      %p134 = por %p132, %p133
      %s135 = ssub.s32 %s17, %s24
      %p136 = scmp.eq.s32.totalorder %s135, 0
      %s138 = sadd.s32 %s137, 1
      %s139 = scalar_select %p136, %s137, %s138
      %p142 = pneg %p136
      %p143 = scmp.eq.s32.totalorder %s17, 1
      %p144 = por %p142, %p143
      %p145 = scmp.ne.s32.totalorder %s137, %s140
      %p146 = scmp.eq.s32.totalorder %s17, 0
      %p147 = por %p145, %p146
      %p148 = scmp.ne.s32.totalorder %s137, %s140
      %p149 = scmp.eq.s32.totalorder %s22, 1
      %p150 = por %p148, %p149
      %p151 = scmp.ne.s32.totalorder %s140, %s141
      %p152 = scmp.eq.s32.totalorder %s22, 0
      %p153 = por %p151, %p152
      %p154 = scmp.ne.s32.totalorder %s140, %s141
      %p155 = scmp.eq.s32.totalorder %s23, 1
      %p156 = por %p154, %p155
      %p158 = scmp.ne.s32.totalorder %s141, %s157
      %p159 = scmp.eq.s32.totalorder %s23, 0
      %p160 = por %p158, %p159
      %p161 = scmp.le.s32.totalorder 1, %s17
      %p162 = scmp.lt.s32.totalorder %s17, 3
      %p163 = pnand %p161, %p162
      %p164 = pneg %p163
      // Predicated region
      $region9: #{tpu_custom_call.1} parent=5 // pred_check
        _
      $region10: #{tpu_custom_call.1} parent=5 // pred_check_branch
        %166 = sbr.rel (%p163) target = $region12
      $region11: #{tpu_custom_call.1} parent=5 // pred_region
        %s167 = ssub.s32 %s17, 1
        // Predicated region
        $region13: #{tpu_custom_call.1} parent=11 // pred_check
          %p168 = pneg %p64
        $region14: #{tpu_custom_call.1} parent=11 // pred_check_branch
          %170 = sbr.rel (%p168) target = $region16
        $region15: #{tpu_custom_call.1} parent=11 // pred_region
          _
        $region16: #{tpu_custom_call.1} parent=11 // pred_fallthru
          _
        // Predicated region
        $region17: #{tpu_custom_call.1} parent=11 // pred_check
          %p171 = pneg %p85
        $region18: #{tpu_custom_call.1} parent=11 // pred_check_branch
          %173 = sbr.rel (%p171) target = $region20
        $region19: #{tpu_custom_call.1} parent=11 // pred_region
          _
        $region20: #{tpu_custom_call.1} parent=11 // pred_fallthru
          _
        // Predicated region
        $region21: #{tpu_custom_call.1} parent=11 // pred_check
          %p174 = pneg %p106
        $region22: #{tpu_custom_call.1} parent=11 // pred_check_branch
          %176 = sbr.rel (%p174) target = $region24
        $region23: #{tpu_custom_call.1} parent=11 // pred_region
          _
        $region24: #{tpu_custom_call.1} parent=11 // pred_fallthru
          _
        // Predicated region
        $region25: #{tpu_custom_call.1} parent=11 // pred_check
          %p177 = pneg %p127
        $region26: #{tpu_custom_call.1} parent=11 // pred_check_branch
          %179 = sbr.rel (%p177) target = $region28
        $region27: #{tpu_custom_call.1} parent=11 // pred_region
          _
        $region28: #{tpu_custom_call.1} parent=11 // pred_fallthru
          _
      $region12: #{tpu_custom_call.1} parent=5 // pred_fallthru
        _
      %p180 = scmp.lt.s32.totalorder %s17, 2
      // Predicated region
      $region29: #{tpu_custom_call.1} parent=5 // pred_check
        %p181 = pneg %p180
      $region30: #{tpu_custom_call.1} parent=5 // pred_check_branch
        %183 = sbr.rel (%p181) target = $region32
      $region31: #{tpu_custom_call.1} parent=5 // pred_region
        // Predicated region
        $region33: #{tpu_custom_call.1} parent=31 // pred_check
          %p184 = pneg %p37
        $region34: #{tpu_custom_call.1} parent=31 // pred_check_branch
          %186 = sbr.rel (%p184) target = $region36
        $region35: #{tpu_custom_call.1} parent=31 // pred_region
          %s187 = sand.u32 %s27, 1
          %s188 = scalar_lea.sflag [#allocation3], %s187
          %s189 = sand.u32 %s27, 1
          %s190 = smul.addr %s189, 16
          %s191 = scalar_lea.vmem [#allocation2], %s190
          %193 = vsyncadd %s188, 0
          %s194 = smul.addr %s17, 2
          %s195 = smul.addr %s194, 8
          %s196 = scalar_lea.hbm %s0, %s195
          %s197 = sshll.u32 %s196, 4
          %s198 = int_to_ptr.hbm [resolvable:$true] %s197
          %s199 = sshll.u32 %s191, 4
          %s200 = int_to_ptr.vmem [resolvable:$true] %s199
          %205 = dma.hbm_to_vmem [thread:$0]  %s198, 256, %s200, %s188, 128, 128, 8
        $region36: #{tpu_custom_call.1} parent=31 // pred_fallthru
          _
      $region32: #{tpu_custom_call.1} parent=5 // pred_fallthru
        _
      %p206 = scmp.le.s32.totalorder 1, %s17
      %p207 = scmp.lt.s32.totalorder %s17, 3
      %p208 = pnand %p206, %p207
      %p209 = pneg %p208
      // Predicated region
      $region37: #{tpu_custom_call.1} parent=5 // pred_check
        _
      $region38: #{tpu_custom_call.1} parent=5 // pred_check_branch
        %211 = sbr.rel (%p208) target = $region40
      $region39: #{tpu_custom_call.1} parent=5 // pred_region
        %s212 = ssub.s32 %s17, 1
        %s213 = sand.u32 %s30, 1
        %s214 = scalar_lea.sflag [#allocation3], %s213
        %s215 = sand.u32 %s30, 1
        %s216 = smul.addr %s215, 16
        %s217 = scalar_lea.vmem [#allocation2], %s216
        // Predicated region
        $region41: #{tpu_custom_call.1} parent=39 // pred_check
          %p218 = pneg %p43
        $region42: #{tpu_custom_call.1} parent=39 // pred_check_branch
          %220 = sbr.rel (%p218) target = $region44
        $region43: #{tpu_custom_call.1} parent=39 // pred_region
          %222 = dma.done %s214, 256
        $region44: #{tpu_custom_call.1} parent=39 // pred_fallthru
          _
        %s223 = sand.u32 %s30, 1
        %s224 = scalar_lea.sflag [#allocation3], %s223
        %s225 = sand.u32 %s30, 1
        %s226 = smul.addr %s225, 16
        %s227 = scalar_lea.vmem [#allocation2], %s226
        %p228 = pneg %p43
        %p229 = pneg %p40
        %p230 = pneg %p64
        %p231 = pneg %p61
        %p232 = pneg %p85
        %p233 = pneg %p82
        %p234 = pneg %p106
        %p235 = pneg %p103
        %p236 = pneg %p127
        %p237 = pneg %p124
        %p238 = pneg %p153
        %p239 = pneg %p150
        %s240 = sand.u32 %s140, 1
        %s241 = scalar_lea.sflag [#allocation4], %s240
        %s242 = sand.u32 %s140, 1
        %s243 = smul.addr %s242, 2
        %s244 = scalar_lea.vmem [#allocation5], %s243
        %v246 = vld [vmem:[%s217] sm:$0xff]
        %v247 = vld [vmem:[%s217 + $0x8] sm:$0xff]
        %v248 = vpack.c.bf16 %v246, %v246
        %v249 = vpack.c.bf16 %v247, %v247
        %v250 = vld [vmem:[%s4] sm:$0x1]
        %v251 = vld [vmem:[%s1] sm:$0xf]
        %v254 = vunpack.c.l.b16 %v248
        %v255 = vunpack.c.l.b16 %v249
        %v256 = vpack.c.b16 %v255, %v254
        %257 = vrot.lane.b32.xlu0 %v256, 9
        %v258 = vpop.permute.xlu0 %257
        %vm259 = vcmask 72704
        %v262 = vsel %vm259, 0, %v258
        %vm263 = vcmask 596992
        %v264 = vsel %vm263, %v262, 0
        %v267 = vpack.i.b16 %v250, %v250
        %v269 = vperm.slane %v267, 0
        %v270 = vunpack.c.l.bf16 %v264
        %v271 = vunpack.c.h.bf16 %v264
        %v272 = vunpack.c.l.bf16 %v269
        %v273 = vmul.f32 %v270, %v272
        %v274 = vmul.f32 %v271, %v272
        %v275 = vpack.c.bf16 %v274, %v273
        %277 = vst [vmem:[#allocation1] ss:$4 sm:$0xff] %v251
        %v278 = vld.sshfl [vmem:[#allocation1] sm:$0xff pattern:$0x73625140]
        %280 = vrot.lane.b32.xlu0 %v278, 112
        %v281 = vpop.permute.xlu0 %280
        %283 = vrot.lane.b32.xlu0 %v264, 127
        %v284 = vpop.permute.xlu0 %283
        %vm286 = vcmask 130048
        %v288 = vsel %vm286, %v281, 0
        %290 = vmatpush.bf16.msra.mxu0 0
        %291 = vmatpush.bf16.msra.mxu0 0
        %292 = vmatpush.bf16.msra.mxu0 0
        %293 = vmatpush.bf16.msra.mxu0 0
        %294 = vmatpush.bf16.msra.mxu0 0
        %295 = vmatpush.bf16.msra.mxu0 0
        %296 = vmatpush.bf16.msra.mxu0 0
        %297 = vmatpush.bf16.msra.mxu0 %v284
        %298 = vmatmul.bf16.gmra.mxu0 %v288
        %v299 = vpop.f32.mrf.mxu0
        %v300 = vadd.f32 0.0, %v299
        %v301 = vpop.f32.mrf.mxu0
        %302 = vdwg.mxu0
        %v303 = vsel %vm286, %v251, 0
        %305 = vmatpush.bf16.msra.mxu0 0
        %306 = vmatpush.bf16.msra.mxu0 0
        %307 = vmatpush.bf16.msra.mxu0 0
        %308 = vmatpush.bf16.msra.mxu0 0
        %309 = vmatpush.bf16.msra.mxu0 0
        %310 = vmatpush.bf16.msra.mxu0 0
        %311 = vmatpush.bf16.msra.mxu0 0
        %312 = vmatpush.bf16.msra.mxu0 %v275
        %313 = vmatmul.bf16.gmra.mxu0 %v303
        %v314 = vpop.f32.mrf.mxu0
        %v315 = vadd.f32 %v300, %v314
        %v316 = vpop.f32.mrf.mxu0
        %317 = vdwg.mxu0
        %v318 = vshrl.u32 %v250, 16
        %v319 = vpack.i.b16 %v318, %v318
        %v321 = vperm.slane %v319, 0
        %v322 = vunpack.c.l.bf16 %v321
        %324 = vrot.lane.b32.xlu0 %v322, 2
        %v325 = vpop.permute.xlu0 %324
        %v327 = vmul.f32 %v270, %v325
        %v328 = vmul.f32 %v271, %v325
        %v329 = vpack.c.bf16 %v328, %v327
        %330 = vst [vmem:[#allocation1] ss:$4 sm:$0xff] %v251
        %v331 = vld.sshfl [vmem:[#allocation1] sm:$0xff pattern:$0x73625140]
        %333 = vrot.lane.b32.xlu0 %v331, 96
        %v334 = vpop.permute.xlu0 %333
        %336 = vrot.lane.b32.xlu0 %v329, 126
        %v337 = vpop.permute.xlu0 %336
        %v340 = vsel %vm286, %v334, 0
        %342 = vmatpush.bf16.msra.mxu0 0
        %343 = vmatpush.bf16.msra.mxu0 0
        %344 = vmatpush.bf16.msra.mxu0 0
        %345 = vmatpush.bf16.msra.mxu0 0
        %346 = vmatpush.bf16.msra.mxu0 0
        %347 = vmatpush.bf16.msra.mxu0 0
        %348 = vmatpush.bf16.msra.mxu0 0
        %349 = vmatpush.bf16.msra.mxu0 %v337
        %350 = vmatmul.bf16.gmra.mxu0 %v340
        %v351 = vpop.f32.mrf.mxu0
        %v352 = vadd.f32 0.0, %v351
        %v353 = vpop.f32.mrf.mxu0
        %354 = vdwg.mxu0
        %v355 = vadd.f32 %v315, %v352
        %357 = vrot.lane.b32.xlu0 %v272, 8
        %v358 = vpop.permute.xlu0 %357
        %v360 = vmul.f32 %v270, %v358
        %v361 = vmul.f32 %v271, %v358
        %v362 = vpack.c.bf16 %v361, %v360
        %363 = vst [vmem:[#allocation1] ss:$4 sm:$0xff] %v251
        %v364 = vld.sshfl [vmem:[#allocation1] sm:$0xff pattern:$0x73625140]
        %366 = vrot.lane.b32.xlu0 %v364, 80
        %v367 = vpop.permute.xlu0 %366
        %369 = vrot.lane.b32.xlu0 %v362, 120
        %v370 = vpop.permute.xlu0 %369
        %v373 = vsel %vm286, %v367, 0
        %375 = vmatpush.bf16.msra.mxu0 0
        %376 = vmatpush.bf16.msra.mxu0 0
        %377 = vmatpush.bf16.msra.mxu0 0
        %378 = vmatpush.bf16.msra.mxu0 0
        %379 = vmatpush.bf16.msra.mxu0 0
        %380 = vmatpush.bf16.msra.mxu0 0
        %381 = vmatpush.bf16.msra.mxu0 0
        %382 = vmatpush.bf16.msra.mxu0 %v370
        %383 = vmatmul.bf16.gmra.mxu0 %v373
        %v384 = vpop.f32.mrf.mxu0
        %v385 = vadd.f32 0.0, %v384
        %v386 = vpop.f32.mrf.mxu0
        %387 = vdwg.mxu0
        %v388 = vadd.f32 %v355, %v385
        %389 = vst [vmem:[#allocation1] ss:$4 sm:$0xff] %v251
        %v390 = vld.sshfl [vmem:[#allocation1] sm:$0xff pattern:$0x73625140]
        %392 = vrot.lane.b32.xlu0 %v390, 64
        %v393 = vpop.permute.xlu0 %392
        %394 = vrot.lane.b32.xlu0 %v264, 119
        %v395 = vpop.permute.xlu0 %394
        %v398 = vsel %vm286, %v393, 0
        %400 = vmatpush.bf16.msra.mxu0 0
        %401 = vmatpush.bf16.msra.mxu0 0
        %402 = vmatpush.bf16.msra.mxu0 0
        %403 = vmatpush.bf16.msra.mxu0 0
        %404 = vmatpush.bf16.msra.mxu0 0
        %405 = vmatpush.bf16.msra.mxu0 0
        %406 = vmatpush.bf16.msra.mxu0 0
        %407 = vmatpush.bf16.msra.mxu0 %v395
        %408 = vmatmul.bf16.gmra.mxu0 %v398
        %v409 = vpop.f32.mrf.mxu0
        %v410 = vadd.f32 0.0, %v409
        %v411 = vpop.f32.mrf.mxu0
        %412 = vdwg.mxu0
        %v413 = vadd.f32 %v388, %v410
        %414 = vrot.lane.b32.xlu0 %v322, 10
        %v415 = vpop.permute.xlu0 %414
        %v417 = vmul.f32 %v270, %v415
        %v418 = vmul.f32 %v271, %v415
        %v419 = vpack.c.bf16 %v418, %v417
        %420 = vst [vmem:[#allocation1] ss:$4 sm:$0xff] %v251
        %v421 = vld.sshfl [vmem:[#allocation1] sm:$0xff pattern:$0x73625140]
        %423 = vrot.lane.b32.xlu0 %v421, 48
        %v424 = vpop.permute.xlu0 %423
        %426 = vrot.lane.b32.xlu0 %v419, 118
        %v427 = vpop.permute.xlu0 %426
        %v430 = vsel %vm286, %v424, 0
        %432 = vmatpush.bf16.msra.mxu0 0
        %433 = vmatpush.bf16.msra.mxu0 0
        %434 = vmatpush.bf16.msra.mxu0 0
        %435 = vmatpush.bf16.msra.mxu0 0
        %436 = vmatpush.bf16.msra.mxu0 0
        %437 = vmatpush.bf16.msra.mxu0 0
        %438 = vmatpush.bf16.msra.mxu0 0
        %439 = vmatpush.bf16.msra.mxu0 %v427
        %440 = vmatmul.bf16.gmra.mxu0 %v430
        %v441 = vpop.f32.mrf.mxu0
        %v442 = vadd.f32 0.0, %v441
        %v443 = vpop.f32.mrf.mxu0
        %444 = vdwg.mxu0
        %v445 = vadd.f32 %v413, %v442
        %446 = vrot.lane.b32.xlu0 %v272, 16
        %v447 = vpop.permute.xlu0 %446
        %v449 = vmul.f32 %v270, %v447
        %v450 = vmul.f32 %v271, %v447
        %v451 = vpack.c.bf16 %v450, %v449
        %452 = vst [vmem:[#allocation1] ss:$4 sm:$0xff] %v251
        %v453 = vld.sshfl [vmem:[#allocation1] sm:$0xff pattern:$0x73625140]
        %455 = vrot.lane.b32.xlu0 %v453, 32
        %v456 = vpop.permute.xlu0 %455
        %458 = vrot.lane.b32.xlu0 %v451, 112
        %v459 = vpop.permute.xlu0 %458
        %v462 = vsel %vm286, %v456, 0
        %464 = vmatpush.bf16.msra.mxu0 0
        %465 = vmatpush.bf16.msra.mxu0 0
        %466 = vmatpush.bf16.msra.mxu0 0
        %467 = vmatpush.bf16.msra.mxu0 0
        %468 = vmatpush.bf16.msra.mxu0 0
        %469 = vmatpush.bf16.msra.mxu0 0
        %470 = vmatpush.bf16.msra.mxu0 0
        %471 = vmatpush.bf16.msra.mxu0 %v459
        %472 = vmatmul.bf16.gmra.mxu0 %v462
        %v473 = vpop.f32.mrf.mxu0
        %v474 = vadd.f32 0.0, %v473
        %v475 = vpop.f32.mrf.mxu0
        %476 = vdwg.mxu0
        %v477 = vadd.f32 %v445, %v474
        %478 = vst [vmem:[#allocation1] ss:$4 sm:$0xff] %v251
        %v479 = vld.sshfl [vmem:[#allocation1] sm:$0xff pattern:$0x73625140]
        %481 = vrot.lane.b32.xlu0 %v479, 16
        %v482 = vpop.permute.xlu0 %481
        %483 = vrot.lane.b32.xlu0 %v264, 111
        %v484 = vpop.permute.xlu0 %483
        %v487 = vsel %vm286, %v482, 0
        %489 = vmatpush.bf16.msra.mxu0 0
        %490 = vmatpush.bf16.msra.mxu0 0
        %491 = vmatpush.bf16.msra.mxu0 0
        %492 = vmatpush.bf16.msra.mxu0 0
        %493 = vmatpush.bf16.msra.mxu0 0
        %494 = vmatpush.bf16.msra.mxu0 0
        %495 = vmatpush.bf16.msra.mxu0 0
        %496 = vmatpush.bf16.msra.mxu0 %v484
        %497 = vmatmul.bf16.gmra.mxu0 %v487
        %v498 = vpop.f32.mrf.mxu0
        %v499 = vadd.f32 0.0, %v498
        %v500 = vpop.f32.mrf.mxu0
        %501 = vdwg.mxu0
        %v502 = vadd.f32 %v477, %v499
        %503 = vrot.lane.b32.xlu0 %v322, 18
        %v504 = vpop.permute.xlu0 %503
        %v506 = vmul.f32 %v270, %v504
        %v507 = vmul.f32 %v271, %v504
        %v508 = vpack.c.bf16 %v507, %v506
        %509 = vst [vmem:[#allocation1] ss:$4 sm:$0xff] %v251
        %v510 = vld.sshfl [vmem:[#allocation1 + $0x8] sm:$0xff pattern:$0x73625140]
        %512 = vrot.lane.b32.xlu0 %v508, 110
        %v513 = vpop.permute.xlu0 %512
        %v515 = vsel %vm286, %v510, 0
        %517 = vmatpush.bf16.msra.mxu0 0
        %518 = vmatpush.bf16.msra.mxu0 0
        %519 = vmatpush.bf16.msra.mxu0 0
        %520 = vmatpush.bf16.msra.mxu0 0
        %521 = vmatpush.bf16.msra.mxu0 0
        %522 = vmatpush.bf16.msra.mxu0 0
        %523 = vmatpush.bf16.msra.mxu0 0
        %524 = vmatpush.bf16.msra.mxu0 %v513
        %525 = vmatmul.bf16.gmra.mxu0 %v515
        %v526 = vpop.f32.mrf.mxu0
        %v527 = vadd.f32 0.0, %v526
        %v528 = vpop.f32.mrf.mxu0
        %529 = vdwg.mxu0
        %v530 = vadd.f32 %v502, %v527
        %v531 = vld [vmem:[%s2] sm:$0xf]
        %533 = vset.pattern.permute.xlu0 0
        %534 = vperm.xlu0 %533, %v531
        %v535 = vpop.permute.xlu0 %534
        %v537 = vmul.f32 %v530, %v535
        %v538 = vld [vmem:[%s3] sm:$0xf]
        %540 = vset.pattern.permute.xlu0 0
        %541 = vperm.xlu0 %540, %v538
        %v542 = vpop.permute.xlu0 %541
        %v544 = vadd.f32 %v537, %v542
        %v545 = vmax.f32 %v544, 0.0
        %v546 = vpack.c.bf16 %v545, %v545
        %vm547 = vcmask 517120
        %548 = vst.msk [vmem:[%s244] sm:$0x3] %vm547, %v546
        %s549 = sand.u32 %s140, 1
        %s550 = scalar_lea.sflag [#allocation4], %s549
        %s551 = sand.u32 %s140, 1
        %s552 = smul.addr %s551, 2
        %s553 = scalar_lea.vmem [#allocation5], %s552
        // Predicated region
        $region45: #{tpu_custom_call.1} parent=39 // pred_check
          %p554 = pneg %p150
        $region46: #{tpu_custom_call.1} parent=39 // pred_check_branch
          %556 = sbr.rel (%p554) target = $region48
        $region47: #{tpu_custom_call.1} parent=39 // pred_region
          %558 = vsyncadd %s550, 0
          %s559 = smul.addr %s22, 2
          %s560 = scalar_lea.hbm %s5, %s559
          %s562 = sshll.u32 %s553, 4
          %s563 = int_to_ptr.vmem [resolvable:$true] %s562
          %s564 = sshll.u32 %s560, 4
          %s565 = int_to_ptr.hbm [resolvable:$true] %s564
          %567 = dma.vmem_to_hbm [thread:$0]  %s563, 32, %s565, %s550
        $region48: #{tpu_custom_call.1} parent=39 // pred_fallthru
          _
      $region40: #{tpu_custom_call.1} parent=5 // pred_fallthru
        _
      %p568 = scmp.le.s32.totalorder 2, %s17
      // Predicated region
      $region49: #{tpu_custom_call.1} parent=5 // pred_check
        %p569 = pneg %p568
      $region50: #{tpu_custom_call.1} parent=5 // pred_check_branch
        %571 = sbr.rel (%p569) target = $region52
      $region51: #{tpu_custom_call.1} parent=5 // pred_region
        %s572 = ssub.s32 %s17, 2
        // Predicated region
        $region53: #{tpu_custom_call.1} parent=51 // pred_check
          %p573 = pneg %p156
        $region54: #{tpu_custom_call.1} parent=51 // pred_check_branch
          %575 = sbr.rel (%p573) target = $region56
        $region55: #{tpu_custom_call.1} parent=51 // pred_region
          %s576 = sand.u32 %s141, 1
          %s577 = scalar_lea.sflag [#allocation4], %s576
          %s578 = sand.u32 %s141, 1
          %s579 = smul.addr %s578, 2
          %s580 = scalar_lea.vmem [#allocation5], %s579
          %582 = dma.done %s577, 32
        $region56: #{tpu_custom_call.1} parent=51 // pred_fallthru
          _
      $region52: #{tpu_custom_call.1} parent=5 // pred_fallthru
        _
    $region6: #{tpu_custom_call.1} parent=1 // loop_footer
      %s21 = sadd.s32 1, %s17
    $region7: #{tpu_custom_call.1} parent=1 // loop_footer_branch
      %16 = sbr.rel target = $region3
    $region8: #{tpu_custom_call.1} parent=1 // loop_exit
      _
    %583 = vsyncpa [#allocation3], 1
    %s584 = scalar_lea.sflag [#allocation3], 1
    %585 = vsyncpa %s584, 1
    %586 = vsyncpa [#allocation4], 1
    %s587 = scalar_lea.sflag [#allocation4], 1
    %588 = vsyncpa %s587, 1

</llo_original>
